<compile_context>
chip_gen: v6e
topology: v6e:2x2x1
jax: 0.10.0
libtpu: 0.0.40
codegen_flags: <defaults>
</compile_context>

<pallas_src>
import jax
import jax.numpy as jnp
from jax.experimental import pallas as pl
from jax.experimental.pallas import tpu as pltpu

_LANE = 128
_TARGET_BLOCK_BYTES = 4 * 1024 * 1024   # ~4 MiB per block buffer
_VMEM_LIMIT_BYTES = 32 * 1024 * 1024    # 4 bufs x 4 MiB double-buffered + headroom


def _scale_kernel(scale_ref, x_ref, o_ref):
    # scale_ref: SMEM (1,) f32; x_ref/o_ref: VMEM (tile_rows, 128) tiles.
    # One vmul per vreg; the kernel is entirely DMA/HBM bound.
    o_ref[...] = (x_ref[...] * scale_ref[0]).astype(o_ref.dtype)


def _sublane_granularity(itemsize: int) -> int:
    # Minimum sublane tile: 8 rows for 4-byte, 16 for 2-byte, 32 for 1-byte dtypes.
    return max(8, 32 // max(1, itemsize))


def _scale_2d(x2d: jax.Array, scale: jax.Array, out_dtype) -> jax.Array:
    """x2d: (rows, 128) with rows a multiple of the sublane granularity."""
    rows, lane = x2d.shape
    in_size = jnp.dtype(x2d.dtype).itemsize
    out_size = jnp.dtype(out_dtype).itemsize
    gran = _sublane_granularity(min(in_size, out_size))

    # Largest block (rows of 128 lanes) that keeps every buffer <= ~4 MiB,
    # rounded down to the sublane granularity. No divisor search: cdiv grid +
    # Pallas masking handles a partial last block.
    bytes_per_row = lane * max(in_size, out_size)
    max_rows = max(gran, (_TARGET_BLOCK_BYTES // bytes_per_row) // gran * gran)
    tile_rows = min(max_rows, rows)
    grid = (pl.cdiv(rows, tile_rows),)

    return pl.pallas_call(
        _scale_kernel,
        out_shape=jax.ShapeDtypeStruct((rows, lane), out_dtype),
        grid_spec=pltpu.PrefetchScalarGridSpec(
            num_scalar_prefetch=0,
            grid=grid,
            in_specs=[
                pl.BlockSpec(memory_space=pltpu.SMEM),          # scale scalar
                pl.BlockSpec((tile_rows, lane), lambda i: (i, 0)),
            ],
            out_specs=pl.BlockSpec((tile_rows, lane), lambda i: (i, 0)),
        ),
        compiler_params=pltpu.CompilerParams(
            dimension_semantics=("parallel",),
            vmem_limit_bytes=_VMEM_LIMIT_BYTES,
        ),
    )(scale, x2d)


def scale_forward(x: jax.Array, scale: jax.Array) -> jax.Array:
    """x: any-shape array (NCHW in the reference); scale: f32[1] parameter."""
    # Match PyTorch type promotion: bf16 * f32 parameter -> f32.
    out_dtype = jnp.result_type(x.dtype, scale.dtype)
    total = x.size
    gran = _sublane_granularity(
        min(jnp.dtype(x.dtype).itemsize, jnp.dtype(out_dtype).itemsize)
    )
    align = gran * _LANE

    if total > 0 and total % align == 0:
        # Common case (typical NCHW activations): free reshape, one pallas_call.
        rows = total // _LANE
        out2d = _scale_2d(jnp.reshape(x, (rows, _LANE)),
                          scale.astype(jnp.float32), out_dtype)
        return jnp.reshape(out2d, x.shape)

    # Ragged shapes: a plain XLA elementwise multiply is already at the HBM
    # roofline (and can fuse with neighbors); kernel + concatenate would only
    # add an extra full read/write pass.
    return (x * scale[0]).astype(out_dtype)


if __name__ == "__main__":
    key = jax.random.PRNGKey(0)
    # NCHW input, consistent with a conv-head usage of Scale.
    x = jax.random.normal(key, (2, 4, 16, 16), dtype=jnp.float32)

    # nn.Parameter(torch.tensor([init])) with a non-trivial value so the
    # multiply is actually exercised.
    init = 1.0
    scale = jnp.array([init * 2.5], dtype=jnp.float32)

    out = jax.block_until_ready(scale_forward(x, scale))
    ref = x * scale[0]
    assert out.shape == x.shape and out.dtype == ref.dtype
    assert jnp.allclose(out, ref, atol=1e-6, rtol=1e-6)

    # Also exercise a shape that takes the ragged (plain-XLA) fallback path.
    x2 = jax.random.normal(jax.random.PRNGKey(1), (3, 5, 7, 11), dtype=jnp.float32)
    out2 = jax.block_until_ready(scale_forward(x2, scale))
    assert jnp.allclose(out2, x2 * scale[0], atol=1e-6, rtol=1e-6)

    print("KERNEL_OK")
</pallas_src>

<mosaic_0001>
module attributes {stable_mosaic.version = 11 : i64} {
  func.func @_scale_kernel(%arg0: i32, %arg1: memref<1xf32, #tpu.memory_space<smem>>, %arg2: memref<16x128xf32, #tpu.memory_space<vmem>>, %arg3: memref<16x128xf32, #tpu.memory_space<vmem>>) attributes {dimension_semantics = [#tpu.dimension_semantics<parallel>], iteration_bounds = array<i64: 1>, scalar_prefetch = 0 : i64, scratch_operands = 0 : i64, tpu.core_type = #tpu.core_type<tc>, window_params = [{transform_indices = @transform_0, window_bounds = array<i64: 1>}, {transform_indices = @transform_1, window_bounds = array<i64: 16, 128>}, {transform_indices = @transform_2, window_bounds = array<i64: 16, 128>}]} {
    %c0 = arith.constant 0 : index
    %c0_0 = arith.constant 0 : index
    %0 = vector.load %arg2[%c0, %c0_0] : memref<16x128xf32, #tpu.memory_space<vmem>>, vector<16x128xf32>
    %c0_1 = arith.constant 0 : index
    %1 = memref.load %arg1[%c0_1] : memref<1xf32, #tpu.memory_space<smem>>
    %2 = vector.broadcast %1 : f32 to vector<16x128xf32>
    %3 = arith.mulf %0, %2 : vector<16x128xf32>
    %c0_2 = arith.constant 0 : index
    %c0_3 = arith.constant 0 : index
    %4 = vector.load %arg3[%c0_2, %c0_3] : memref<16x128xf32, #tpu.memory_space<vmem>>, vector<16x128xf32>
    tpu.vector_store %arg3[%c0_2, %c0_3], %3 {strides = array<i32>} : memref<16x128xf32, #tpu.memory_space<vmem>>, vector<16x128xf32>,
    return
  }
  func.func @transform_0(%arg0: i32) -> i32 {
    %c0_i32 = arith.constant 0 : i32
    %c0_i32_0 = arith.constant 0 : i32
    return %c0_i32 : i32
  }
  func.func @transform_1(%arg0: i32) -> (i32, i32) {
    %c0_i32 = arith.constant 0 : i32
    %c0_i32_0 = arith.constant 0 : i32
    return %arg0, %c0_i32 : i32, i32
  }
  func.func @transform_2(%arg0: i32) -> (i32, i32) {
    %c0_i32 = arith.constant 0 : i32
    %c0_i32_0 = arith.constant 0 : i32
    return %arg0, %c0_i32 : i32, i32
  }
}

</mosaic_0001>

<llo_original>
// kernel: tpu_custom_call.1
$region0: #{tpu_custom_call.1}
  #allocation0 [shape = 'u32[]', space=smem, size = 0x4, offset = 0x4, fixed_abs, tag = 'smem constant byte address 0x4 - core index']
  #allocation1 [shape = 'u32[144,128]{1,0:T(1,128)}', space=vmem, size = 0x12000, scoped, tag = 'internal scratch']
  #allocation2 [shape = 'f32[1]{0:T(128)S(6)}', space=smem, size = 0x200, scoped, tag = 'scoped memory for tpu_custom_call.1']
  %s0 = inlined_call_operand.<no memory space> [shape: f32[1], index: 0, kind: input, shape index: {}]
  %s1 = inlined_call_operand.hbm [shape: f32[16,128], index: 1, kind: input, shape index: {}]
  %s2 = inlined_call_operand.hbm [shape: f32[16,128], index: 2, kind: output, shape index: {}]
  %s3 = sld [smem:[#allocation0]]
  $region22: #{tpu_custom_call.1} parent=0
    _
  %s5 = ssub.s32 1, %s3
  %s6 = scalar_select 0, %s5, %s3
  %7 = sst [smem:[#allocation2]] %s0
  $region1: #{tpu_custom_call.1} parent=0
    #allocation3 [shape = 'u8[8192]{0}', space=vmem, size = 0x2000, scoped, tag = 'input window, operand 1, single buffered']
    #allocation4 [shape = 's32[1]{0}', space=sflag, size = 0x4, scoped, tag = 'scoped memory for tpu_custom_call.1']
    #allocation5 [shape = 's32[1]{0}', space=sflag, size = 0x4, scoped, tag = 'scoped memory for tpu_custom_call.1']
    #allocation6 [shape = 'u8[8192]{0}', space=vmem, size = 0x2000, scoped, tag = 'output window, operand 0, single buffered']
    %8 = vsyncpa [#allocation4], 0
    %9 = vsyncpa [#allocation5], 0
    // Predicated region
    $region2: #{tpu_custom_call.1} parent=1 // pred_check
      _
    $region3: #{tpu_custom_call.1} parent=1 // pred_check_branch
      %11 = sbr.rel (0) target = $region5
    $region4: #{tpu_custom_call.1} parent=1 // pred_region
      _
    $region5: #{tpu_custom_call.1} parent=1 // pred_fallthru
      _
    // Predicated region
    $region6: #{tpu_custom_call.1} parent=1 // pred_check
      _
    $region7: #{tpu_custom_call.1} parent=1 // pred_check_branch
      %13 = sbr.rel (0) target = $region9
    $region8: #{tpu_custom_call.1} parent=1 // pred_region
      %s15 = ssub.s32 256, 256
      %16 = vsyncadd [#allocation4], %s15
      %s17 = sshll.u32 [#allocation3], 4
      %s18 = int_to_ptr.vmem [resolvable:$true] %s17
      %23 = dma.hbm_to_vmem [thread:$0]  %s1, 256, %s18, [#allocation4], 128, 128, 8
    $region9: #{tpu_custom_call.1} parent=1 // pred_fallthru
      _
    // Predicated region
    $region10: #{tpu_custom_call.1} parent=1 // pred_check
      _
    $region11: #{tpu_custom_call.1} parent=1 // pred_check_branch
      %25 = sbr.rel (0) target = $region13
    $region12: #{tpu_custom_call.1} parent=1 // pred_region
      %26 = dma.done [#allocation4], 256
    $region13: #{tpu_custom_call.1} parent=1 // pred_fallthru
      _
    %v27 = vld [vmem:[#allocation3] sm:$0xff]
    %v28 = vld [vmem:[#allocation3 + $0x8] sm:$0xff]
    %s29 = sld [smem:[#allocation2]]
    %v30 = vstv %s29
    %v31 = vmul.f32 %v27, %v30
    %v32 = vmul.f32 %v28, %v30
    %33 = vst [vmem:[#allocation6] sm:$0xff] %v31
    %34 = vst [vmem:[#allocation6 + $0x8] sm:$0xff] %v32
    // Predicated region
    $region14: #{tpu_custom_call.1} parent=1 // pred_check
      _
    $region15: #{tpu_custom_call.1} parent=1 // pred_check_branch
      %36 = sbr.rel (0) target = $region17
    $region16: #{tpu_custom_call.1} parent=1 // pred_region
      %s38 = ssub.s32 256, 256
      %39 = vsyncadd [#allocation5], %s38
      %s40 = sshll.u32 [#allocation6], 4
      %s41 = int_to_ptr.vmem [resolvable:$true] %s40
      %46 = dma.vmem_to_hbm [thread:$0]  %s41, 256, %s2, [#allocation5], 128, 128, 8
    $region17: #{tpu_custom_call.1} parent=1 // pred_fallthru
      _
    // Predicated region
    $region18: #{tpu_custom_call.1} parent=1 // pred_check
      _
    $region19: #{tpu_custom_call.1} parent=1 // pred_check_branch
      %48 = sbr.rel (0) target = $region21
    $region20: #{tpu_custom_call.1} parent=1 // pred_region
      %49 = dma.done [#allocation5], 256
    $region21: #{tpu_custom_call.1} parent=1 // pred_fallthru
      _
    %50 = vsyncpa [#allocation4], 1
    %51 = vsyncpa [#allocation5], 1

</llo_original>
